<compile_context>
chip_gen: v6e
topology: v6e:2x2x1
jax: 0.10.0
libtpu: 0.0.40
codegen_flags: <defaults>
</compile_context>

<pallas_src>
import jax
import jax.numpy as jnp
from jax.experimental import pallas as pl
from jax.experimental.pallas import tpu as pltpu


def _round_up(x, m):
    return ((x + m - 1) // m) * m


# ---------------------------------------------------------------------------
# Kernels
# ---------------------------------------------------------------------------

def _dynproj_kernel_merged(pc_ref, pf_ref, wa_ref, ba_ref, w1_ref, b1_ref,
                           w2_ref, b2_ref, out_ref, comb_ref):
    """Merged-K variant: one K = 2*d_coarse contraction for the MLP's first
    layer via a VMEM concat scratch (fills the 256-deep MXU on v6e/v7x)."""
    cdt = wa_ref.dtype                              # MXU operand dtype
    pc = pc_ref[...]                                # [TB, d_coarse]
    pf = pf_ref[...]                                # [TB, d_fine]

    # P_fine_aligned = P_fine @ W_align + b_align   (f32 accumulation)
    aligned = jnp.dot(pf.astype(cdt), wa_ref[...],
                      preferred_element_type=jnp.float32) + ba_ref[...]

    # combined = concat([P_coarse, aligned], -1) written into a VMEM scratch
    # so the first MLP layer is a single K = 2*d_coarse MXU contraction.
    d_coarse = pc.shape[-1]
    comb_ref[:, :d_coarse] = pc.astype(cdt)
    comb_ref[:, d_coarse:] = aligned.astype(cdt)

    h = jnp.dot(comb_ref[...], w1_ref[...],
                preferred_element_type=jnp.float32) + b1_ref[...]
    h = jnp.maximum(h, 0.0)                         # ReLU

    # Second linear has a single output unit: VPU multiply + XLU lane sum.
    # hidden is zero-padded to 128 lanes; padded cols of W1/b1/w2 are zero,
    # so the reduction is unchanged.
    logit = jnp.sum(h * w2_ref[...], axis=-1, keepdims=True) + b2_ref[0]
    alpha = jax.nn.sigmoid(logit)                   # [TB, 1]

    # alpha*pc + (1-alpha)*aligned  ==  aligned + alpha*(pc - aligned)
    out_ref[...] = (aligned + alpha * (pc - aligned)).astype(out_ref.dtype)


def _dynproj_kernel_splitk(pc_ref, pf_ref, wa_ref, ba_ref, w1c_ref, w1f_ref,
                           b1_ref, w2_ref, b2_ref, out_ref):
    """Split-K variant (v5e): combined @ W1 == pc @ W1[:d] + aligned @ W1[d:];
    K = d_coarse already fills the 128-deep MXU, so no concat scratch."""
    cdt = wa_ref.dtype
    pc = pc_ref[...]
    pf = pf_ref[...]

    aligned = jnp.dot(pf.astype(cdt), wa_ref[...],
                      preferred_element_type=jnp.float32) + ba_ref[...]

    h = (jnp.dot(pc.astype(cdt), w1c_ref[...], preferred_element_type=jnp.float32)
         + jnp.dot(aligned.astype(cdt), w1f_ref[...],
                   preferred_element_type=jnp.float32)
         + b1_ref[...])
    h = jnp.maximum(h, 0.0)

    logit = jnp.sum(h * w2_ref[...], axis=-1, keepdims=True) + b2_ref[0]
    alpha = jax.nn.sigmoid(logit)

    out_ref[...] = (aligned + alpha * (pc - aligned)).astype(out_ref.dtype)


# ---------------------------------------------------------------------------
# Wrapper
# ---------------------------------------------------------------------------

def _vmem_capacity_bytes():
    try:
        return int(pltpu.get_tpu_info().vmem_capacity_bytes)
    except Exception:
        return 64 << 20        # conservative default: v7x per-TensorCore VMEM


def _is_v5e():
    try:
        kind = jax.devices()[0].device_kind.lower()
        return ("v5 lite" in kind) or ("v5e" in kind) or ("v5lite" in kind)
    except Exception:
        return False


def dynamic_projector(P_coarse, P_fine, params, *, block_b=None,
                      mxu_dtype=jnp.float32, merge_k=None):
    B, d_coarse = P_coarse.shape
    _, d_fine = P_fine.shape
    hidden = params["b1"].shape[-1]
    f32 = jnp.float32
    if merge_k is None:
        # K = 2*d_coarse fills the 256-deep MXU on v6e/v7x; v5e keeps split-K.
        merge_k = not _is_v5e()

    # ---- weight prep (host side, once per call) ---------------------------
    hp = _round_up(hidden, 128)                      # lane-dense hidden dim
    wbytes = jnp.dtype(mxu_dtype).itemsize
    wa = params["wa"].astype(mxu_dtype)              # [d_fine, d_coarse]
    ba = params["ba"].reshape(1, d_coarse).astype(f32)
    w1 = jnp.pad(params["w1"].astype(mxu_dtype), ((0, 0), (0, hp - hidden)))
    b1 = jnp.pad(params["b1"].astype(f32), (0, hp - hidden)).reshape(1, hp)
    w2 = jnp.pad(params["w2"].astype(f32), (0, hp - hidden)).reshape(1, hp)
    b2 = params["b2"].reshape(1).astype(f32)         # SMEM scalar

    # ---- VMEM accounting & batch tiling ------------------------------------
    weight_bytes = (wbytes * (d_fine * d_coarse + 2 * d_coarse * hp)
                    + 4 * (d_coarse + 2 * hp + 1))
    # pipelined (double-buffered) I/O blocks per batch row
    io_row = 4 * 2 * (2 * d_coarse + d_fine)
    # in-kernel intermediates per row: aligned + h (+ merged-K concat scratch)
    live_row = 4 * (d_coarse + hp) + (wbytes * 2 * d_coarse if merge_k else 0)
    per_row = io_row + live_row

    cap = _vmem_capacity_bytes()
    budget = (cap * 5) // 8                           # ~40 MiB v7x, ~80 MiB v5e/v6e
    if block_b is None:
        fit = (budget - 2 * weight_bytes) // per_row
        tb = max(256, min(2048, fit))                 # >=256-row floor for MXU util
    else:
        tb = block_b
    # Keep >=2 grid steps whenever possible (v7x megacore + DMA/compute
    # overlap) and never oversize the tile past (half) the batch.
    tb = min(tb, _round_up(pl.cdiv(B, 2), 8))
    tb = max(8, (tb // 8) * 8)                        # sublane multiple

    grid = (pl.cdiv(B, tb),)                          # ragged last tile is masked
    need = 2 * weight_bytes + tb * per_row + (2 << 20)   # + compiler scratch slack
    vmem_limit = int(min(max(need, 16 << 20), (cap * 7) // 8))

    cost = pl.CostEstimate(
        flops=int(2 * B * d_coarse * (d_fine + 2 * hp) + 2 * B * hp
                  + 6 * B * d_coarse),
        transcendentals=int(B),
        bytes_accessed=int(4 * B * (d_fine + 2 * d_coarse) + weight_bytes),
    )

    batched = lambda w: pl.BlockSpec((tb, w), lambda i: (i, 0))
    resident = lambda shape: pl.BlockSpec(shape, lambda i: tuple(0 for _ in shape))
    # TODO(synk): constant-index weight blocks could be single-buffered
    # (pipeline_mode=pl.Buffered(1)) to halve resident-weight VMEM on v7x, and
    # the batched specs bumped to Buffered(3) on v5e if xprof shows exposed
    # DMA; left at defaults here (negligible at these weight sizes).

    if merge_k:
        kernel = _dynproj_kernel_merged
        weight_args = (wa, ba, w1, b1, w2, b2)
        weight_specs = [
            resident((d_fine, d_coarse)),             # W_align
            resident((1, d_coarse)),                  # b_align
            resident((2 * d_coarse, hp)),             # W1 (unsplit, lane-padded)
            resident((1, hp)),                        # b1
            resident((1, hp)),                        # w2 as a row
            pl.BlockSpec(memory_space=pltpu.MemorySpace.SMEM),   # b2 scalar
        ]
        scratch = [pltpu.VMEM((tb, 2 * d_coarse), mxu_dtype)]
    else:
        kernel = _dynproj_kernel_splitk
        w1c, w1f = w1[:d_coarse], w1[d_coarse:]
        weight_args = (wa, ba, w1c, w1f, b1, w2, b2)
        weight_specs = [
            resident((d_fine, d_coarse)),             # W_align
            resident((1, d_coarse)),                  # b_align
            resident((d_coarse, hp)),                 # W1 coarse half
            resident((d_coarse, hp)),                 # W1 fine half
            resident((1, hp)),                        # b1
            resident((1, hp)),                        # w2 as a row
            pl.BlockSpec(memory_space=pltpu.MemorySpace.SMEM),   # b2 scalar
        ]
        scratch = []

    out = pl.pallas_call(
        kernel,
        out_shape=jax.ShapeDtypeStruct((B, d_coarse), P_coarse.dtype),
        grid=grid,
        in_specs=[batched(d_coarse), batched(d_fine)] + weight_specs,
        out_specs=batched(d_coarse),
        scratch_shapes=scratch,
        compiler_params=pltpu.CompilerParams(
            dimension_semantics=("parallel",),        # megacore split on v7x
            vmem_limit_bytes=vmem_limit),
        cost_estimate=cost,
    )(P_coarse, P_fine, *weight_args)
    return out


# ---------------------------------------------------------------------------
# Params / reference
# ---------------------------------------------------------------------------

def init_params(key, d_coarse, d_fine, hidden):
    ks = jax.random.split(key, 6)
    scale = 0.02
    return {
        "wa": scale * jax.random.normal(ks[0], (d_fine, d_coarse), jnp.float32),
        "ba": scale * jax.random.normal(ks[1], (d_coarse,), jnp.float32),
        "w1": scale * jax.random.normal(ks[2], (2 * d_coarse, hidden), jnp.float32),
        "b1": scale * jax.random.normal(ks[3], (hidden,), jnp.float32),
        "w2": scale * jax.random.normal(ks[4], (hidden,), jnp.float32),
        "b2": scale * jax.random.normal(ks[5], (1,), jnp.float32),
    }


def reference(P_coarse, P_fine, params):
    """Pure-JAX reference mirroring the PyTorch forward."""
    aligned = P_fine @ params["wa"] + params["ba"]
    combined = jnp.concatenate([P_coarse, aligned], axis=1)
    h = jnp.maximum(combined @ params["w1"] + params["b1"], 0.0)
    alpha = jax.nn.sigmoid(h @ params["w2"][:, None] + params["b2"])
    return alpha * P_coarse + (1.0 - alpha) * aligned


if __name__ == "__main__":
    # Small shapes consistent with the module (hidden_dim=64 default);
    # B=50 (number of classes) is deliberately ragged to exercise the
    # unpadded / masked-last-tile path.
    B, d_coarse, d_fine, hidden = 50, 128, 256, 64

    key = jax.random.PRNGKey(0)
    k_pc, k_pf, k_params = jax.random.split(key, 3)
    P_coarse = jax.random.normal(k_pc, (B, d_coarse), jnp.float32)
    P_fine = jax.random.normal(k_pf, (B, d_fine), jnp.float32)
    params = init_params(k_params, d_coarse, d_fine, hidden)

    ref = reference(P_coarse, P_fine, params)

    # 1) Auto-tiled path (f32 MXU; merged-/split-K picked per chip generation,
    #    >=2 grid steps guaranteed).
    out = jax.block_until_ready(dynamic_projector(P_coarse, P_fine, params))
    assert out.shape == (B, d_coarse)
    assert jnp.allclose(out, ref, atol=1e-4, rtol=1e-4)

    # 2) Small explicit tile -> multi-step grid + ragged last tile, split-K path.
    out_s = jax.block_until_ready(
        dynamic_projector(P_coarse, P_fine, params, block_b=16, merge_k=False))
    assert jnp.allclose(out_s, ref, atol=1e-4, rtol=1e-4)

    # 3) bf16 MXU operands with f32 accumulation (biggest perf lever); looser
    #    tolerance vs the f32 reference.
    out_bf = jax.block_until_ready(
        dynamic_projector(P_coarse, P_fine, params,
                          mxu_dtype=jnp.bfloat16, merge_k=True))
    assert jnp.allclose(out_bf, ref, atol=5e-2, rtol=5e-2)

    print("KERNEL_OK")
</pallas_src>

<mosaic_0001>
module attributes {stable_mosaic.version = 11 : i64} {
  func.func @_dynproj_kernel_merged(%arg0: i32, %arg1: memref<32x128xf32, #tpu.memory_space<vmem>>, %arg2: memref<32x256xf32, #tpu.memory_space<vmem>>, %arg3: memref<256x128xf32, #tpu.memory_space<vmem>>, %arg4: memref<1x128xf32, #tpu.memory_space<vmem>>, %arg5: memref<256x128xf32, #tpu.memory_space<vmem>>, %arg6: memref<1x128xf32, #tpu.memory_space<vmem>>, %arg7: memref<1x128xf32, #tpu.memory_space<vmem>>, %arg8: memref<1xf32, #tpu.memory_space<smem>>, %arg9: memref<32x128xf32, #tpu.memory_space<vmem>>, %arg10: memref<32x256xf32, #tpu.memory_space<vmem>>) attributes {dimension_semantics = [#tpu.dimension_semantics<parallel>], iteration_bounds = array<i64: 2>, scalar_prefetch = 0 : i64, scratch_operands = 1 : i64, tpu.core_type = #tpu.core_type<tc>, window_params = [{transform_indices = @transform_0, window_bounds = array<i64: 32, 128>}, {transform_indices = @transform_1, window_bounds = array<i64: 32, 256>}, {pipeline_mode = #tpu.pipeline_mode<synchronous>, transform_indices = @transform_2, window_bounds = array<i64: 256, 128>}, {pipeline_mode = #tpu.pipeline_mode<synchronous>, transform_indices = @transform_3, window_bounds = array<i64: 1, 128>}, {pipeline_mode = #tpu.pipeline_mode<synchronous>, transform_indices = @transform_4, window_bounds = array<i64: 256, 128>}, {pipeline_mode = #tpu.pipeline_mode<synchronous>, transform_indices = @transform_5, window_bounds = array<i64: 1, 128>}, {pipeline_mode = #tpu.pipeline_mode<synchronous>, transform_indices = @transform_6, window_bounds = array<i64: 1, 128>}, {transform_indices = @transform_7, window_bounds = array<i64: 1>}, {transform_indices = @transform_8, window_bounds = array<i64: 32, 128>}]} {
    %c0 = arith.constant 0 : index
    %c0_0 = arith.constant 0 : index
    %0 = vector.load %arg1[%c0, %c0_0] : memref<32x128xf32, #tpu.memory_space<vmem>>, vector<32x128xf32>
    %c0_1 = arith.constant 0 : index
    %c0_2 = arith.constant 0 : index
    %1 = vector.load %arg2[%c0_1, %c0_2] : memref<32x256xf32, #tpu.memory_space<vmem>>, vector<32x256xf32>
    %c0_3 = arith.constant 0 : index
    %c0_4 = arith.constant 0 : index
    %2 = vector.load %arg3[%c0_3, %c0_4] : memref<256x128xf32, #tpu.memory_space<vmem>>, vector<256x128xf32>
    %cst = arith.constant dense<0.000000e+00> : vector<32x128xf32>
    %3 = tpu.matmul %1, %2, %cst {dimension_numbers = #tpu.dot_dimension_numbers<[1], [0], [0], [1], [0, 0, 1, 1], [], []>} : vector<32x256xf32>, vector<256x128xf32>, vector<32x128xf32> -> vector<32x128xf32>
    %c0_5 = arith.constant 0 : index
    %c0_6 = arith.constant 0 : index
    %4 = vector.load %arg4[%c0_5, %c0_6] : memref<1x128xf32, #tpu.memory_space<vmem>>, vector<1x128xf32>
    %5 = vector.broadcast %4 : vector<1x128xf32> to vector<32x128xf32>
    %6 = arith.addf %3, %5 : vector<32x128xf32>
    %c0_7 = arith.constant 0 : index
    %c0_8 = arith.constant 0 : index
    %7 = vector.load %arg10[%c0_7, %c0_8] : memref<32x256xf32, #tpu.memory_space<vmem>>, vector<32x128xf32>
    tpu.vector_store %arg10[%c0_7, %c0_8], %0 {strides = array<i32>} : memref<32x256xf32, #tpu.memory_space<vmem>>, vector<32x128xf32>,
    %c0_9 = arith.constant 0 : index
    %c128 = arith.constant 128 : index
    %8 = vector.load %arg10[%c0_9, %c128] : memref<32x256xf32, #tpu.memory_space<vmem>>, vector<32x128xf32>
    tpu.vector_store %arg10[%c0_9, %c128], %6 {strides = array<i32>} : memref<32x256xf32, #tpu.memory_space<vmem>>, vector<32x128xf32>,
    %c0_10 = arith.constant 0 : index
    %c0_11 = arith.constant 0 : index
    %9 = vector.load %arg10[%c0_10, %c0_11] : memref<32x256xf32, #tpu.memory_space<vmem>>, vector<32x256xf32>
    %c0_12 = arith.constant 0 : index
    %c0_13 = arith.constant 0 : index
    %10 = vector.load %arg5[%c0_12, %c0_13] : memref<256x128xf32, #tpu.memory_space<vmem>>, vector<256x128xf32>
    %cst_14 = arith.constant dense<0.000000e+00> : vector<32x128xf32>
    %11 = tpu.matmul %9, %10, %cst_14 {dimension_numbers = #tpu.dot_dimension_numbers<[1], [0], [0], [1], [0, 0, 1, 1], [], []>} : vector<32x256xf32>, vector<256x128xf32>, vector<32x128xf32> -> vector<32x128xf32>
    %c0_15 = arith.constant 0 : index
    %c0_16 = arith.constant 0 : index
    %12 = vector.load %arg6[%c0_15, %c0_16] : memref<1x128xf32, #tpu.memory_space<vmem>>, vector<1x128xf32>
    %13 = vector.broadcast %12 : vector<1x128xf32> to vector<32x128xf32>
    %14 = arith.addf %11, %13 : vector<32x128xf32>
    %cst_17 = arith.constant 0.000000e+00 : f32
    %15 = vector.broadcast %cst_17 : f32 to vector<32x128xf32>
    %16 = arith.maximumf %14, %15 : vector<32x128xf32>
    %c0_18 = arith.constant 0 : index
    %c0_19 = arith.constant 0 : index
    %17 = vector.load %arg7[%c0_18, %c0_19] : memref<1x128xf32, #tpu.memory_space<vmem>>, vector<1x128xf32>
    %18 = vector.broadcast %17 : vector<1x128xf32> to vector<32x128xf32>
    %19 = arith.mulf %16, %18 : vector<32x128xf32>
    %cst_20 = arith.constant dense<0.000000e+00> : vector<32xf32>
    %20 = vector.multi_reduction <add>, %19, %cst_20 [1] : vector<32x128xf32> to vector<32xf32>
    %21 = vector.shape_cast %20 : vector<32xf32> to vector<32x1xf32>
    %c0_21 = arith.constant 0 : index
    %22 = memref.load %arg8[%c0_21] : memref<1xf32, #tpu.memory_space<smem>>
    %23 = vector.broadcast %22 : f32 to vector<32x1xf32>
    %24 = arith.addf %21, %23 : vector<32x1xf32>
    %25 = arith.negf %24 : vector<32x1xf32>
    %26 = math.exp %25 : vector<32x1xf32>
    %cst_22 = arith.constant 1.000000e+00 : f32
    %27 = vector.broadcast %cst_22 : f32 to vector<32x1xf32>
    %28 = arith.addf %27, %26 : vector<32x1xf32>
    %29 = arith.divf %27, %28 : vector<32x1xf32>
    %30 = arith.subf %0, %6 : vector<32x128xf32>
    %31 = vector.broadcast %29 : vector<32x1xf32> to vector<32x128xf32>
    %32 = arith.mulf %31, %30 : vector<32x128xf32>
    %33 = arith.addf %6, %32 : vector<32x128xf32>
    %c0_23 = arith.constant 0 : index
    %c0_24 = arith.constant 0 : index
    %34 = vector.load %arg9[%c0_23, %c0_24] : memref<32x128xf32, #tpu.memory_space<vmem>>, vector<32x128xf32>
    tpu.vector_store %arg9[%c0_23, %c0_24], %33 {strides = array<i32>} : memref<32x128xf32, #tpu.memory_space<vmem>>, vector<32x128xf32>,
    return
  }
  func.func @transform_0(%arg0: i32) -> (i32, i32) {
    %c0_i32 = arith.constant 0 : i32
    %c0_i32_0 = arith.constant 0 : i32
    return %arg0, %c0_i32 : i32, i32
  }
  func.func @transform_1(%arg0: i32) -> (i32, i32) {
    %c0_i32 = arith.constant 0 : i32
    %c0_i32_0 = arith.constant 0 : i32
    return %arg0, %c0_i32 : i32, i32
  }
  func.func @transform_2(%arg0: i32) -> (i32, i32) {
    %c0_i32 = arith.constant 0 : i32
    %c0_i32_0 = arith.constant 0 : i32
    %c0_i32_1 = arith.constant 0 : i32
    return %c0_i32, %c0_i32_0 : i32, i32
  }
  func.func @transform_3(%arg0: i32) -> (i32, i32) {
    %c0_i32 = arith.constant 0 : i32
    %c0_i32_0 = arith.constant 0 : i32
    %c0_i32_1 = arith.constant 0 : i32
    return %c0_i32, %c0_i32_0 : i32, i32
  }
  func.func @transform_4(%arg0: i32) -> (i32, i32) {
    %c0_i32 = arith.constant 0 : i32
    %c0_i32_0 = arith.constant 0 : i32
    %c0_i32_1 = arith.constant 0 : i32
    return %c0_i32, %c0_i32_0 : i32, i32
  }
  func.func @transform_5(%arg0: i32) -> (i32, i32) {
    %c0_i32 = arith.constant 0 : i32
    %c0_i32_0 = arith.constant 0 : i32
    %c0_i32_1 = arith.constant 0 : i32
    return %c0_i32, %c0_i32_0 : i32, i32
  }
  func.func @transform_6(%arg0: i32) -> (i32, i32) {
    %c0_i32 = arith.constant 0 : i32
    %c0_i32_0 = arith.constant 0 : i32
    %c0_i32_1 = arith.constant 0 : i32
    return %c0_i32, %c0_i32_0 : i32, i32
  }
  func.func @transform_7(%arg0: i32) -> i32 {
    %c0_i32 = arith.constant 0 : i32
    %c0_i32_0 = arith.constant 0 : i32
    return %c0_i32 : i32
  }
  func.func @transform_8(%arg0: i32) -> (i32, i32) {
    %c0_i32 = arith.constant 0 : i32
    %c0_i32_0 = arith.constant 0 : i32
    return %arg0, %c0_i32 : i32, i32
  }
}

</mosaic_0001>

<llo_original>
// kernel: tpu_custom_call.1
$region0: #{tpu_custom_call.1}
  #allocation0 [shape = 'u32[]', space=smem, size = 0x4, offset = 0x4, fixed_abs, tag = 'smem constant byte address 0x4 - core index']
  #allocation1 [shape = 'u32[144,128]{1,0:T(1,128)}', space=vmem, size = 0x12000, scoped, tag = 'internal scratch']
  #allocation2 [shape = 'f32[32,256]{1,0:T(8,128)}', space=vmem, size = 0x8000, scoped, tag = 'scratch operand']
  #allocation3 [shape = 'f32[1]{0:T(128)S(6)}', space=smem, size = 0x200, scoped, tag = 'scoped memory for tpu_custom_call.1']
  %s0 = inlined_call_operand.hbm [shape: f32[50,128], index: 0, kind: input, shape index: {}]
  %s1 = inlined_call_operand.hbm [shape: f32[50,256], index: 1, kind: input, shape index: {}]
  %s2 = inlined_call_operand.hbm [shape: f32[256,128], index: 2, kind: input, shape index: {}]
  %s3 = inlined_call_operand.vmem [shape: f32[1,128], index: 3, kind: input, shape index: {}]
  %s4 = inlined_call_operand.hbm [shape: f32[256,128], index: 4, kind: input, shape index: {}]
  %s5 = inlined_call_operand.vmem [shape: f32[1,128], index: 5, kind: input, shape index: {}]
  %s6 = inlined_call_operand.vmem [shape: f32[1,128], index: 6, kind: input, shape index: {}]
  %s7 = inlined_call_operand.<no memory space> [shape: f32[1], index: 7, kind: input, shape index: {}]
  %s8 = inlined_call_operand.hbm [shape: f32[50,128], index: 8, kind: output, shape index: {}]
  %s9 = sld [smem:[#allocation0]]
  $region81: #{tpu_custom_call.1} parent=0
    _
  %s11 = ssub.s32 1, %s9
  %s12 = scalar_select 0, %s11, %s9
  %13 = sst [smem:[#allocation3]] %s7
  $region1: #{tpu_custom_call.1} parent=0
    #allocation4 [shape = 'u8[32768]{0}', space=vmem, size = 0x8000, scoped, tag = 'input window, operand 0']
    #allocation5 [shape = 's32[2]{0}', space=sflag, size = 0x8, scoped, tag = 'scoped memory for tpu_custom_call.1']
    #allocation6 [shape = 's32[2]{0}', space=sflag, size = 0x8, scoped, tag = 'scoped memory for tpu_custom_call.1']
    #allocation7 [shape = 'u8[65536]{0}', space=vmem, size = 0x10000, scoped, tag = 'input window, operand 1']
    #allocation8 [shape = 's32[2]{0}', space=sflag, size = 0x8, scoped, tag = 'scoped memory for tpu_custom_call.1']
    #allocation9 [shape = 'u8[131072]{0}', space=vmem, size = 0x20000, scoped, tag = 'input window, operand 2, single buffered']
    #allocation10 [shape = 'u8[131072]{0}', space=vmem, size = 0x20000, scoped, tag = 'input window, operand 4, single buffered']
    #allocation11 [shape = 's32[1]{0}', space=sflag, size = 0x4, scoped, tag = 'scoped memory for tpu_custom_call.1']
    #allocation12 [shape = 'u8[32768]{0}', space=vmem, size = 0x8000, scoped, tag = 'output window, operand 0']
    %14 = vsyncpa [#allocation5], 0
    %s15 = scalar_lea.sflag [#allocation5], 1
    %16 = vsyncpa %s15, 0
    %17 = vsyncpa [#allocation8], 0
    %s18 = scalar_lea.sflag [#allocation8], 1
    %19 = vsyncpa %s18, 0
    %20 = vsyncpa [#allocation11], 0
    %21 = vsyncpa [#allocation6], 0
    %s22 = scalar_lea.sflag [#allocation6], 1
    %23 = vsyncpa %s22, 0
    loop: start=0, step=1, limit=4
    $region2: #{tpu_custom_call.1} parent=1 // loop_pre_header
      _
    $region3: #{tpu_custom_call.1} parent=1 // loop_header
      %s25 = sphi 0, %s29
      %p26 = scmp.ge.s32.totalorder %s25, 4
      %s35 = sphi 0, %s37
      %s38 = sphi 0, %s35
      %s39 = sphi 0, %s38
      %s55 = sphi 0, %s39
      %s61 = sphi 0, %s63
      %s64 = sphi 0, %s61
      %s65 = sphi 0, %s64
      %s81 = sphi 0, %s65
      %s85 = sphi 0, %s85
      %s87 = sphi 0, %s85
      %s88 = sphi 0, %s87
      %s102 = sphi 0, %s88
      %s106 = sphi 0, %s106
      %s108 = sphi 0, %s106
      %s109 = sphi 0, %s108
      %s123 = sphi 0, %s109
      %s127 = sphi 0, %s127
      %s129 = sphi 0, %s127
      %s130 = sphi 0, %s129
      %s144 = sphi 0, %s130
      %s148 = sphi 0, %s148
      %s150 = sphi 0, %s148
      %s151 = sphi 0, %s150
      %s165 = sphi 0, %s151
      %s169 = sphi 0, %s169
      %s171 = sphi 0, %s169
      %s172 = sphi 0, %s171
      %s186 = sphi 0, %s172
      %s190 = sphi 0, %s190
      %s192 = sphi 0, %s190
      %s193 = sphi 0, %s192
      %s207 = sphi 0, %s193
      %s213 = sphi 0, %s215
      %s216 = sphi 0, %s213
      %s217 = sphi 0, %s216
      %s233 = sphi 0, %s217
    $region4: #{tpu_custom_call.1} parent=1 // loop_header_branch
      %28 = sbr.rel (%p26) target = $region8
    $region5: #{tpu_custom_call.1} parent=1 // loop_body
      %s30 = ssub.s32 %s25, 1
      %s31 = ssub.s32 %s25, 2
      %s32 = sadd.s32 %s25, 1
      %s33 = ssub.s32 %s25, %s32
      %p34 = scmp.eq.s32.totalorder %s33, 0
      %s36 = sadd.s32 %s35, 1
      %s37 = scalar_select %p34, %s35, %s36
      %p40 = pneg %p34
      %p41 = scmp.eq.s32.totalorder %s25, 1
      %p42 = por %p40, %p41
      %p43 = scmp.ne.s32.totalorder %s35, %s38
      %p44 = scmp.eq.s32.totalorder %s25, 0
      %p45 = por %p43, %p44
      %p46 = scmp.ne.s32.totalorder %s35, %s38
      %p47 = scmp.eq.s32.totalorder %s30, 1
      %p48 = por %p46, %p47
      %p49 = scmp.ne.s32.totalorder %s38, %s39
      %p50 = scmp.eq.s32.totalorder %s30, 0
      %p51 = por %p49, %p50
      %p52 = scmp.ne.s32.totalorder %s38, %s39
      %p53 = scmp.eq.s32.totalorder %s31, 1
      %p54 = por %p52, %p53
      %p56 = scmp.ne.s32.totalorder %s39, %s55
      %p57 = scmp.eq.s32.totalorder %s31, 0
      %p58 = por %p56, %p57
      %s59 = ssub.s32 %s25, %s32
      %p60 = scmp.eq.s32.totalorder %s59, 0
      %s62 = sadd.s32 %s61, 1
      %s63 = scalar_select %p60, %s61, %s62
      %p66 = pneg %p60
      %p67 = scmp.eq.s32.totalorder %s25, 1
      %p68 = por %p66, %p67
      %p69 = scmp.ne.s32.totalorder %s61, %s64
      %p70 = scmp.eq.s32.totalorder %s25, 0
      %p71 = por %p69, %p70
      %p72 = scmp.ne.s32.totalorder %s61, %s64
      %p73 = scmp.eq.s32.totalorder %s30, 1
      %p74 = por %p72, %p73
      %p75 = scmp.ne.s32.totalorder %s64, %s65
      %p76 = scmp.eq.s32.totalorder %s30, 0
      %p77 = por %p75, %p76
      %p78 = scmp.ne.s32.totalorder %s64, %s65
      %p79 = scmp.eq.s32.totalorder %s31, 1
      %p80 = por %p78, %p79
      %p82 = scmp.ne.s32.totalorder %s65, %s81
      %p83 = scmp.eq.s32.totalorder %s31, 0
      %p84 = por %p82, %p83
      %s86 = sadd.s32 %s85, 1
      %p89 = scmp.eq.s32.totalorder %s25, 1
      %p90 = scmp.ne.s32.totalorder %s85, %s87
      %p91 = scmp.eq.s32.totalorder %s25, 0
      %p92 = por %p90, %p91
      %p93 = scmp.ne.s32.totalorder %s85, %s87
      %p94 = scmp.eq.s32.totalorder %s30, 1
      %p95 = por %p93, %p94
      %p96 = scmp.ne.s32.totalorder %s87, %s88
      %p97 = scmp.eq.s32.totalorder %s30, 0
      %p98 = por %p96, %p97
      %p99 = scmp.ne.s32.totalorder %s87, %s88
      %p100 = scmp.eq.s32.totalorder %s31, 1
      %p101 = por %p99, %p100
      %p103 = scmp.ne.s32.totalorder %s88, %s102
      %p104 = scmp.eq.s32.totalorder %s31, 0
      %p105 = por %p103, %p104
      %s107 = sadd.s32 %s106, 1
      %p110 = scmp.eq.s32.totalorder %s25, 1
      %p111 = scmp.ne.s32.totalorder %s106, %s108
      %p112 = scmp.eq.s32.totalorder %s25, 0
      %p113 = por %p111, %p112
      %p114 = scmp.ne.s32.totalorder %s106, %s108
      %p115 = scmp.eq.s32.totalorder %s30, 1
      %p116 = por %p114, %p115
      %p117 = scmp.ne.s32.totalorder %s108, %s109
      %p118 = scmp.eq.s32.totalorder %s30, 0
      %p119 = por %p117, %p118
      %p120 = scmp.ne.s32.totalorder %s108, %s109
      %p121 = scmp.eq.s32.totalorder %s31, 1
      %p122 = por %p120, %p121
      %p124 = scmp.ne.s32.totalorder %s109, %s123
      %p125 = scmp.eq.s32.totalorder %s31, 0
      %p126 = por %p124, %p125
      %s128 = sadd.s32 %s127, 1
      %p131 = scmp.eq.s32.totalorder %s25, 1
      %p132 = scmp.ne.s32.totalorder %s127, %s129
      %p133 = scmp.eq.s32.totalorder %s25, 0
      %p134 = por %p132, %p133
      %p135 = scmp.ne.s32.totalorder %s127, %s129
      %p136 = scmp.eq.s32.totalorder %s30, 1
      %p137 = por %p135, %p136
      %p138 = scmp.ne.s32.totalorder %s129, %s130
      %p139 = scmp.eq.s32.totalorder %s30, 0
      %p140 = por %p138, %p139
      %p141 = scmp.ne.s32.totalorder %s129, %s130
      %p142 = scmp.eq.s32.totalorder %s31, 1
      %p143 = por %p141, %p142
      %p145 = scmp.ne.s32.totalorder %s130, %s144
      %p146 = scmp.eq.s32.totalorder %s31, 0
      %p147 = por %p145, %p146
      %s149 = sadd.s32 %s148, 1
      %p152 = scmp.eq.s32.totalorder %s25, 1
      %p153 = scmp.ne.s32.totalorder %s148, %s150
      %p154 = scmp.eq.s32.totalorder %s25, 0
      %p155 = por %p153, %p154
      %p156 = scmp.ne.s32.totalorder %s148, %s150
      %p157 = scmp.eq.s32.totalorder %s30, 1
      %p158 = por %p156, %p157
      %p159 = scmp.ne.s32.totalorder %s150, %s151
      %p160 = scmp.eq.s32.totalorder %s30, 0
      %p161 = por %p159, %p160
      %p162 = scmp.ne.s32.totalorder %s150, %s151
      %p163 = scmp.eq.s32.totalorder %s31, 1
      %p164 = por %p162, %p163
      %p166 = scmp.ne.s32.totalorder %s151, %s165
      %p167 = scmp.eq.s32.totalorder %s31, 0
      %p168 = por %p166, %p167
      %s170 = sadd.s32 %s169, 1
      %p173 = scmp.eq.s32.totalorder %s25, 1
      %p174 = scmp.ne.s32.totalorder %s169, %s171
      %p175 = scmp.eq.s32.totalorder %s25, 0
      %p176 = por %p174, %p175
      %p177 = scmp.ne.s32.totalorder %s169, %s171
      %p178 = scmp.eq.s32.totalorder %s30, 1
      %p179 = por %p177, %p178
      %p180 = scmp.ne.s32.totalorder %s171, %s172
      %p181 = scmp.eq.s32.totalorder %s30, 0
      %p182 = por %p180, %p181
      %p183 = scmp.ne.s32.totalorder %s171, %s172
      %p184 = scmp.eq.s32.totalorder %s31, 1
      %p185 = por %p183, %p184
      %p187 = scmp.ne.s32.totalorder %s172, %s186
      %p188 = scmp.eq.s32.totalorder %s31, 0
      %p189 = por %p187, %p188
      %s191 = sadd.s32 %s190, 1
      %p194 = scmp.eq.s32.totalorder %s25, 1
      %p195 = scmp.ne.s32.totalorder %s190, %s192
      %p196 = scmp.eq.s32.totalorder %s25, 0
      %p197 = por %p195, %p196
      %p198 = scmp.ne.s32.totalorder %s190, %s192
      %p199 = scmp.eq.s32.totalorder %s30, 1
      %p200 = por %p198, %p199
      %p201 = scmp.ne.s32.totalorder %s192, %s193
      %p202 = scmp.eq.s32.totalorder %s30, 0
      %p203 = por %p201, %p202
      %p204 = scmp.ne.s32.totalorder %s192, %s193
      %p205 = scmp.eq.s32.totalorder %s31, 1
      %p206 = por %p204, %p205
      %p208 = scmp.ne.s32.totalorder %s193, %s207
      %p209 = scmp.eq.s32.totalorder %s31, 0
      %p210 = por %p208, %p209
      %s211 = ssub.s32 %s25, %s32
      %p212 = scmp.eq.s32.totalorder %s211, 0
      %s214 = sadd.s32 %s213, 1
      %s215 = scalar_select %p212, %s213, %s214
      %p218 = pneg %p212
      %p219 = scmp.eq.s32.totalorder %s25, 1
      %p220 = por %p218, %p219
      %p221 = scmp.ne.s32.totalorder %s213, %s216
      %p222 = scmp.eq.s32.totalorder %s25, 0
      %p223 = por %p221, %p222
      %p224 = scmp.ne.s32.totalorder %s213, %s216
      %p225 = scmp.eq.s32.totalorder %s30, 1
      %p226 = por %p224, %p225
      %p227 = scmp.ne.s32.totalorder %s216, %s217
      %p228 = scmp.eq.s32.totalorder %s30, 0
      %p229 = por %p227, %p228
      %p230 = scmp.ne.s32.totalorder %s216, %s217
      %p231 = scmp.eq.s32.totalorder %s31, 1
      %p232 = por %p230, %p231
      %p234 = scmp.ne.s32.totalorder %s217, %s233
      %p235 = scmp.eq.s32.totalorder %s31, 0
      %p236 = por %p234, %p235
      %p237 = scmp.le.s32.totalorder 1, %s25
      %p238 = scmp.lt.s32.totalorder %s25, 3
      %p239 = pnand %p237, %p238
      %p240 = pneg %p239
      // Predicated region
      $region9: #{tpu_custom_call.1} parent=5 // pred_check
        _
      $region10: #{tpu_custom_call.1} parent=5 // pred_check_branch
        %242 = sbr.rel (%p239) target = $region12
      $region11: #{tpu_custom_call.1} parent=5 // pred_region
        %s243 = ssub.s32 %s25, 1
        // Predicated region
        $region13: #{tpu_custom_call.1} parent=11 // pred_check
          %p244 = pneg %p98
        $region14: #{tpu_custom_call.1} parent=11 // pred_check_branch
          %246 = sbr.rel (%p244) target = $region16
        $region15: #{tpu_custom_call.1} parent=11 // pred_region
          %s248 = ssub.s32 4096, 4096
          %249 = vsyncadd [#allocation8], %s248
          %s250 = sshll.u32 [#allocation9], 4
          %s251 = int_to_ptr.vmem [resolvable:$true] %s250
          %256 = dma.hbm_to_vmem [thread:$0]  %s2, 4096, %s251, [#allocation8], 128, 128, 8
        $region16: #{tpu_custom_call.1} parent=11 // pred_fallthru
          _
        // Predicated region
        $region17: #{tpu_custom_call.1} parent=11 // pred_check
          %p257 = pneg %p119
        $region18: #{tpu_custom_call.1} parent=11 // pred_check_branch
          %259 = sbr.rel (%p257) target = $region20
        $region19: #{tpu_custom_call.1} parent=11 // pred_region
          _
        $region20: #{tpu_custom_call.1} parent=11 // pred_fallthru
          _
        // Predicated region
        $region21: #{tpu_custom_call.1} parent=11 // pred_check
          %p260 = pneg %p140
        $region22: #{tpu_custom_call.1} parent=11 // pred_check_branch
          %262 = sbr.rel (%p260) target = $region24
        $region23: #{tpu_custom_call.1} parent=11 // pred_region
          %s264 = ssub.s32 4096, 4096
          %265 = vsyncadd [#allocation11], %s264
          %s266 = sshll.u32 [#allocation10], 4
          %s267 = int_to_ptr.vmem [resolvable:$true] %s266
          %272 = dma.hbm_to_vmem [thread:$0]  %s4, 4096, %s267, [#allocation11], 128, 128, 8
        $region24: #{tpu_custom_call.1} parent=11 // pred_fallthru
          _
        // Predicated region
        $region25: #{tpu_custom_call.1} parent=11 // pred_check
          %p273 = pneg %p161
        $region26: #{tpu_custom_call.1} parent=11 // pred_check_branch
          %275 = sbr.rel (%p273) target = $region28
        $region27: #{tpu_custom_call.1} parent=11 // pred_region
          _
        $region28: #{tpu_custom_call.1} parent=11 // pred_fallthru
          _
        // Predicated region
        $region29: #{tpu_custom_call.1} parent=11 // pred_check
          %p276 = pneg %p182
        $region30: #{tpu_custom_call.1} parent=11 // pred_check_branch
          %278 = sbr.rel (%p276) target = $region32
        $region31: #{tpu_custom_call.1} parent=11 // pred_region
          _
        $region32: #{tpu_custom_call.1} parent=11 // pred_fallthru
          _
        // Predicated region
        $region33: #{tpu_custom_call.1} parent=11 // pred_check
          %p279 = pneg %p203
        $region34: #{tpu_custom_call.1} parent=11 // pred_check_branch
          %281 = sbr.rel (%p279) target = $region36
        $region35: #{tpu_custom_call.1} parent=11 // pred_region
          _
        $region36: #{tpu_custom_call.1} parent=11 // pred_fallthru
          _
      $region12: #{tpu_custom_call.1} parent=5 // pred_fallthru
        _
      %p282 = scmp.lt.s32.totalorder %s25, 2
      // Predicated region
      $region37: #{tpu_custom_call.1} parent=5 // pred_check
        %p283 = pneg %p282
      $region38: #{tpu_custom_call.1} parent=5 // pred_check_branch
        %285 = sbr.rel (%p283) target = $region40
      $region39: #{tpu_custom_call.1} parent=5 // pred_region
        // Predicated region
        $region41: #{tpu_custom_call.1} parent=39 // pred_check
          %p286 = pneg %p45
        $region42: #{tpu_custom_call.1} parent=39 // pred_check_branch
          %288 = sbr.rel (%p286) target = $region44
        $region43: #{tpu_custom_call.1} parent=39 // pred_region
          %s289 = sand.u32 %s35, 1
          %s290 = scalar_lea.sflag [#allocation5], %s289
          %s291 = sand.u32 %s35, 1
          %s292 = smul.addr %s291, 32
          %s293 = scalar_lea.vmem [#allocation4], %s292
          %s294 = smul.u32 4, %s25
          %s295 = ssub.s32 7, %s294
          %p296 = scmp.lt.s32.totalorder %s295, 4
          %s297 = scalar_select %p296, %s295, 4
          %s298 = smul.u32 128, %s297
          %s300 = ssub.s32 512, %s298
          %301 = vsyncadd %s290, %s300
          %p302 = scmp.ne.s32.totalorder 0, %s298
          %s303 = smul.addr %s294, 128
          %s304 = scalar_lea.hbm %s0, %s303
          %s305 = smul.u32 8, %s297
          %s306 = sshll.u32 %s293, 4
          %s307 = int_to_ptr.vmem [resolvable:$true] %s306
          %s308 = sshll.u32 %s305, 4
          %312 = dma.hbm_to_vmem [thread:$0]  (%p302), %s304, %s308, %s307, %s290, 128, 128, 8
        $region44: #{tpu_custom_call.1} parent=39 // pred_fallthru
          _
        // Predicated region
        $region45: #{tpu_custom_call.1} parent=39 // pred_check
          %p313 = pneg %p71
        $region46: #{tpu_custom_call.1} parent=39 // pred_check_branch
          %315 = sbr.rel (%p313) target = $region48
        $region47: #{tpu_custom_call.1} parent=39 // pred_region
          %s316 = sand.u32 %s25, 1
          %s317 = scalar_lea.sflag [#allocation8], %s316
          %s318 = sand.u32 %s61, 1
          %s319 = smul.addr %s318, 64
          %s320 = scalar_lea.vmem [#allocation7], %s319
          %s321 = smul.u32 4, %s25
          %s322 = ssub.s32 7, %s321
          %p323 = scmp.lt.s32.totalorder %s322, 4
          %s324 = scalar_select %p323, %s322, 4
          %s325 = smul.u32 128, %s324
          %s326 = smul.u32 %s325, 2
          %s328 = ssub.s32 1024, %s326
          %329 = vsyncadd %s317, %s328
          %p330 = scmp.ne.s32.totalorder 0, %s326
          %s331 = smul.addr %s321, 2
          %s332 = smul.addr %s331, 128
          %s333 = scalar_lea.hbm %s1, %s332
          %s334 = smul.u32 16, %s324
          %s335 = sshll.u32 %s320, 4
          %s336 = int_to_ptr.vmem [resolvable:$true] %s335
          %s337 = sshll.u32 %s334, 4
          %341 = dma.hbm_to_vmem [thread:$0]  (%p330), %s333, %s337, %s336, %s317, 256, 256, 16
        $region48: #{tpu_custom_call.1} parent=39 // pred_fallthru
          _
      $region40: #{tpu_custom_call.1} parent=5 // pred_fallthru
        _
      %p342 = scmp.le.s32.totalorder 1, %s25
      %p343 = scmp.lt.s32.totalorder %s25, 3
      %p344 = pnand %p342, %p343
      %p345 = pneg %p344
      // Predicated region
      $region49: #{tpu_custom_call.1} parent=5 // pred_check
        _
      $region50: #{tpu_custom_call.1} parent=5 // pred_check_branch
        %347 = sbr.rel (%p344) target = $region52
      $region51: #{tpu_custom_call.1} parent=5 // pred_region
        %s348 = ssub.s32 %s25, 1
        %s349 = sand.u32 %s38, 1
        %s350 = scalar_lea.sflag [#allocation5], %s349
        %s351 = sand.u32 %s38, 1
        %s352 = smul.addr %s351, 32
        %s353 = scalar_lea.vmem [#allocation4], %s352
        // Predicated region
        $region53: #{tpu_custom_call.1} parent=51 // pred_check
          %p354 = pneg %p51
        $region54: #{tpu_custom_call.1} parent=51 // pred_check_branch
          %356 = sbr.rel (%p354) target = $region56
        $region55: #{tpu_custom_call.1} parent=51 // pred_region
          %357 = dma.done %s350, 512
        $region56: #{tpu_custom_call.1} parent=51 // pred_fallthru
          _
        %s358 = sand.u32 %s30, 1
        %s359 = scalar_lea.sflag [#allocation8], %s358
        %s360 = sand.u32 %s64, 1
        %s361 = smul.addr %s360, 64
        %s362 = scalar_lea.vmem [#allocation7], %s361
        // Predicated region
        $region57: #{tpu_custom_call.1} parent=51 // pred_check
          %p363 = pneg %p77
        $region58: #{tpu_custom_call.1} parent=51 // pred_check_branch
          %365 = sbr.rel (%p363) target = $region60
        $region59: #{tpu_custom_call.1} parent=51 // pred_region
          %366 = dma.done %s359, 1024
        $region60: #{tpu_custom_call.1} parent=51 // pred_fallthru
          _
        // Predicated region
        $region61: #{tpu_custom_call.1} parent=51 // pred_check
          %p367 = pneg %p98
        $region62: #{tpu_custom_call.1} parent=51 // pred_check_branch
          %369 = sbr.rel (%p367) target = $region64
        $region63: #{tpu_custom_call.1} parent=51 // pred_region
          %370 = dma.done [#allocation8], 4096
        $region64: #{tpu_custom_call.1} parent=51 // pred_fallthru
          _
        // Predicated region
        $region65: #{tpu_custom_call.1} parent=51 // pred_check
          %p371 = pneg %p140
        $region66: #{tpu_custom_call.1} parent=51 // pred_check_branch
          %373 = sbr.rel (%p371) target = $region68
        $region67: #{tpu_custom_call.1} parent=51 // pred_region
          %374 = dma.done [#allocation11], 4096
        $region68: #{tpu_custom_call.1} parent=51 // pred_fallthru
          _
        %s375 = sand.u32 %s38, 1
        %s376 = scalar_lea.sflag [#allocation5], %s375
        %s377 = sand.u32 %s38, 1
        %s378 = smul.addr %s377, 32
        %s379 = scalar_lea.vmem [#allocation4], %s378
        %p380 = pneg %p51
        %p381 = pneg %p48
        %s382 = sand.u32 %s30, 1
        %s383 = scalar_lea.sflag [#allocation8], %s382
        %s384 = sand.u32 %s64, 1
        %s385 = smul.addr %s384, 64
        %s386 = scalar_lea.vmem [#allocation7], %s385
        %p387 = pneg %p77
        %p388 = pneg %p74
        %p389 = pneg %p98
        %p390 = pneg %p95
        %p391 = pneg %p119
        %p392 = pneg %p116
        %p393 = pneg %p140
        %p394 = pneg %p137
        %p395 = pneg %p161
        %p396 = pneg %p158
        %p397 = pneg %p182
        %p398 = pneg %p179
        %p399 = pneg %p203
        %p400 = pneg %p200
        %p401 = pneg %p229
        %p402 = pneg %p226
        %s403 = sand.u32 %s216, 1
        %s404 = scalar_lea.sflag [#allocation6], %s403
        %s405 = sand.u32 %s216, 1
        %s406 = smul.addr %s405, 32
        %s407 = scalar_lea.vmem [#allocation12], %s406
        %s408 = smul.u32 4, %s30
        %s409 = ssub.s32 7, %s408
        %p410 = scmp.lt.s32.totalorder %s409, 4
        %s411 = scalar_select %p410, %s409, 4
        %s412 = smul.u32 128, %s411
        %s413 = smul.u32 4, %s30
        %s414 = ssub.s32 7, %s413
        %p415 = scmp.lt.s32.totalorder %s414, 4
        %s416 = scalar_select %p415, %s414, 4
        %s417 = smul.u32 128, %s416
        %s418 = smul.u32 %s417, 2
        %s419 = smul.u32 4, %s30
        %s420 = ssub.s32 7, %s419
        %p421 = scmp.lt.s32.totalorder %s420, 4
        %s422 = scalar_select %p421, %s420, 4
        %s423 = smul.u32 128, %s422
        %v424 = vld [vmem:[%s353] sm:$0xff]
        %v425 = vld [vmem:[%s353 + $0x8] sm:$0xff]
        %v426 = vld [vmem:[%s353 + $0x10] sm:$0xff]
        %v427 = vld [vmem:[%s353 + $0x18] sm:$0xff]
        %v428 = vld [vmem:[%s362] sm:$0xff]
        %v429 = vld [vmem:[%s362 + $0x8] sm:$0xff]
        %v430 = vld [vmem:[%s362 + $0x10] sm:$0xff]
        %v431 = vld [vmem:[%s362 + $0x18] sm:$0xff]
        %v432 = vld [vmem:[%s362 + $0x20] sm:$0xff]
        %v433 = vld [vmem:[%s362 + $0x28] sm:$0xff]
        %v434 = vld [vmem:[%s362 + $0x30] sm:$0xff]
        %v435 = vld [vmem:[%s362 + $0x38] sm:$0xff]
        %v436 = vld [vmem:[#allocation9] sm:$0xff]
        %v437 = vld [vmem:[#allocation9 + $0x8] sm:$0xff]
        %v438 = vld [vmem:[#allocation9 + $0x10] sm:$0xff]
        %v439 = vld [vmem:[#allocation9 + $0x18] sm:$0xff]
        %v440 = vld [vmem:[#allocation9 + $0x20] sm:$0xff]
        %v441 = vld [vmem:[#allocation9 + $0x28] sm:$0xff]
        %v442 = vld [vmem:[#allocation9 + $0x30] sm:$0xff]
        %v443 = vld [vmem:[#allocation9 + $0x38] sm:$0xff]
        %v444 = vld [vmem:[#allocation9 + $0x40] sm:$0xff]
        %v445 = vld [vmem:[#allocation9 + $0x48] sm:$0xff]
        %v446 = vld [vmem:[#allocation9 + $0x50] sm:$0xff]
        %v447 = vld [vmem:[#allocation9 + $0x58] sm:$0xff]
        %v448 = vld [vmem:[#allocation9 + $0x60] sm:$0xff]
        %v449 = vld [vmem:[#allocation9 + $0x68] sm:$0xff]
        %v450 = vld [vmem:[#allocation9 + $0x70] sm:$0xff]
        %v451 = vld [vmem:[#allocation9 + $0x78] sm:$0xff]
        %v452 = vld [vmem:[#allocation9 + $0x80] sm:$0xff]
        %v453 = vld [vmem:[#allocation9 + $0x88] sm:$0xff]
        %v454 = vld [vmem:[#allocation9 + $0x90] sm:$0xff]
        %v455 = vld [vmem:[#allocation9 + $0x98] sm:$0xff]
        %v456 = vld [vmem:[#allocation9 + $0xa0] sm:$0xff]
        %v457 = vld [vmem:[#allocation9 + $0xa8] sm:$0xff]
        %v458 = vld [vmem:[#allocation9 + $0xb0] sm:$0xff]
        %v459 = vld [vmem:[#allocation9 + $0xb8] sm:$0xff]
        %v460 = vld [vmem:[#allocation9 + $0xc0] sm:$0xff]
        %v461 = vld [vmem:[#allocation9 + $0xc8] sm:$0xff]
        %v462 = vld [vmem:[#allocation9 + $0xd0] sm:$0xff]
        %v463 = vld [vmem:[#allocation9 + $0xd8] sm:$0xff]
        %v464 = vld [vmem:[#allocation9 + $0xe0] sm:$0xff]
        %v465 = vld [vmem:[#allocation9 + $0xe8] sm:$0xff]
        %v466 = vld [vmem:[#allocation9 + $0xf0] sm:$0xff]
        %v467 = vld [vmem:[#allocation9 + $0xf8] sm:$0xff]
        %v468 = vld [vmem:[%s3] sm:$0x1]
        %v470 = vlaneseq
        %v471 = vshrl.u32 %v470, 7
        %v472 = vsub.s32 0, %v471
        %v473 = vrot.slane %v468, %v472
        %475 = vmatprep.subr.mxu0 0.0
        %476 = vmatpush1.msra.mxu0 %v451
        %477 = vmatprep.subr.mxu0 0.0
        %478 = vmatpush1.msra.mxu0 %v450
        %479 = vmatprep.subr.mxu0 0.0
        %480 = vmatpush1.msra.mxu0 %v449
        %481 = vmatprep.subr.mxu0 0.0
        %482 = vmatpush1.msra.mxu0 %v448
        %483 = vmatprep.subr.mxu0 0.0
        %484 = vmatpush1.msra.mxu0 %v447
        %485 = vmatprep.subr.mxu0 0.0
        %486 = vmatpush1.msra.mxu0 %v446
        %487 = vmatprep.subr.mxu0 0.0
        %488 = vmatpush1.msra.mxu0 %v445
        %489 = vmatprep.subr.mxu0 0.0
        %490 = vmatpush1.msra.mxu0 %v444
        %491 = vmatprep.subr.mxu0 0.0
        %492 = vmatpush1.msra.mxu0 %v443
        %493 = vmatprep.subr.mxu0 0.0
        %494 = vmatpush1.msra.mxu0 %v442
        %495 = vmatprep.subr.mxu0 0.0
        %496 = vmatpush1.msra.mxu0 %v441
        %497 = vmatprep.subr.mxu0 0.0
        %498 = vmatpush1.msra.mxu0 %v440
        %499 = vmatprep.subr.mxu0 0.0
        %500 = vmatpush1.msra.mxu0 %v439
        %501 = vmatprep.subr.mxu0 0.0
        %502 = vmatpush1.msra.mxu0 %v438
        %503 = vmatprep.subr.mxu0 0.0
        %504 = vmatpush1.msra.mxu0 %v437
        %505 = vmatprep.subr.mxu0 0.0
        %506 = vmatpush1.msra.mxu0 %v436
        %507 = vmatprep.subr.mxu0 0.0
        %508 = vmatpush2.msra.mxu0 %v467
        %509 = vmatprep.subr.mxu0 0.0
        %510 = vmatpush2.msra.mxu0 %v466
        %511 = vmatprep.subr.mxu0 0.0
        %512 = vmatpush2.msra.mxu0 %v465
        %513 = vmatprep.subr.mxu0 0.0
        %514 = vmatpush2.msra.mxu0 %v464
        %515 = vmatprep.subr.mxu0 0.0
        %516 = vmatpush2.msra.mxu0 %v463
        %517 = vmatprep.subr.mxu0 0.0
        %518 = vmatpush2.msra.mxu0 %v462
        %519 = vmatprep.subr.mxu0 0.0
        %520 = vmatpush2.msra.mxu0 %v461
        %521 = vmatprep.subr.mxu0 0.0
        %522 = vmatpush2.msra.mxu0 %v460
        %523 = vmatprep.subr.mxu0 0.0
        %524 = vmatpush2.msra.mxu0 %v459
        %525 = vmatprep.subr.mxu0 0.0
        %526 = vmatpush2.msra.mxu0 %v458
        %527 = vmatprep.subr.mxu0 0.0
        %528 = vmatpush2.msra.mxu0 %v457
        %529 = vmatprep.subr.mxu0 0.0
        %530 = vmatpush2.msra.mxu0 %v456
        %531 = vmatprep.subr.mxu0 0.0
        %532 = vmatpush2.msra.mxu0 %v455
        %533 = vmatprep.subr.mxu0 0.0
        %534 = vmatpush2.msra.mxu0 %v454
        %535 = vmatprep.subr.mxu0 0.0
        %536 = vmatpush2.msra.mxu0 %v453
        %537 = vmatprep.subr.mxu0 0.0
        %538 = vmatpush2.msra.mxu0 %v452
        %539 = vmatprep.mubr.f32.mxu0 %v429
        %540 = vmatmul.mubr.f32.gmra.mxu0 %v428
        %v541 = vpop.f32.mrf.mxu0
        %v542 = vadd.f32 %v473, %v541
        %v543 = vpop.f32.mrf.mxu0
        %544 = vmatprep.mubr.f32.mxu0 %v431
        %545 = vmatmul.mubr.f32.gmra.mxu0 %v430
        %v546 = vpop.f32.mrf.mxu0
        %v547 = vadd.f32 %v473, %v546
        %v548 = vpop.f32.mrf.mxu0
        %549 = vmatprep.mubr.f32.mxu0 %v433
        %550 = vmatmul.mubr.f32.gmra.mxu0 %v432
        %v551 = vpop.f32.mrf.mxu0
        %v552 = vadd.f32 %v473, %v551
        %v553 = vpop.f32.mrf.mxu0
        %554 = vmatprep.mubr.f32.mxu0 %v435
        %555 = vmatmul.mubr.f32.gmra.mxu0 %v434
        %v556 = vpop.f32.mrf.mxu0
        %v557 = vadd.f32 %v473, %v556
        %v558 = vpop.f32.mrf.mxu0
        %559 = vdwg.mxu0
        %560 = vst [vmem:[#allocation2] sm:$0xff] %v424
        %561 = vst [vmem:[#allocation2 + $0x10] sm:$0xff] %v425
        %562 = vst [vmem:[#allocation2 + $0x20] sm:$0xff] %v426
        %563 = vst [vmem:[#allocation2 + $0x30] sm:$0xff] %v427
        %564 = vst [vmem:[#allocation2 + $0x8] sm:$0xff] %v542
        %565 = vst [vmem:[#allocation2 + $0x18] sm:$0xff] %v547
        %566 = vst [vmem:[#allocation2 + $0x28] sm:$0xff] %v552
        %567 = vst [vmem:[#allocation2 + $0x38] sm:$0xff] %v557
        %v568 = vld [vmem:[#allocation2] sm:$0xff]
        %v569 = vld [vmem:[#allocation2 + $0x8] sm:$0xff]
        %v570 = vld [vmem:[#allocation2 + $0x10] sm:$0xff]
        %v571 = vld [vmem:[#allocation2 + $0x18] sm:$0xff]
        %v572 = vld [vmem:[#allocation2 + $0x20] sm:$0xff]
        %v573 = vld [vmem:[#allocation2 + $0x28] sm:$0xff]
        %v574 = vld [vmem:[#allocation2 + $0x30] sm:$0xff]
        %v575 = vld [vmem:[#allocation2 + $0x38] sm:$0xff]
        %v576 = vld [vmem:[#allocation10] sm:$0xff]
        %v577 = vld [vmem:[#allocation10 + $0x8] sm:$0xff]
        %v578 = vld [vmem:[#allocation10 + $0x10] sm:$0xff]
        %v579 = vld [vmem:[#allocation10 + $0x18] sm:$0xff]
        %v580 = vld [vmem:[#allocation10 + $0x20] sm:$0xff]
        %v581 = vld [vmem:[#allocation10 + $0x28] sm:$0xff]
        %v582 = vld [vmem:[#allocation10 + $0x30] sm:$0xff]
        %v583 = vld [vmem:[#allocation10 + $0x38] sm:$0xff]
        %v584 = vld [vmem:[#allocation10 + $0x40] sm:$0xff]
        %v585 = vld [vmem:[#allocation10 + $0x48] sm:$0xff]
        %v586 = vld [vmem:[#allocation10 + $0x50] sm:$0xff]
        %v587 = vld [vmem:[#allocation10 + $0x58] sm:$0xff]
        %v588 = vld [vmem:[#allocation10 + $0x60] sm:$0xff]
        %v589 = vld [vmem:[#allocation10 + $0x68] sm:$0xff]
        %v590 = vld [vmem:[#allocation10 + $0x70] sm:$0xff]
        %v591 = vld [vmem:[#allocation10 + $0x78] sm:$0xff]
        %v592 = vld [vmem:[#allocation10 + $0x80] sm:$0xff]
        %v593 = vld [vmem:[#allocation10 + $0x88] sm:$0xff]
        %v594 = vld [vmem:[#allocation10 + $0x90] sm:$0xff]
        %v595 = vld [vmem:[#allocation10 + $0x98] sm:$0xff]
        %v596 = vld [vmem:[#allocation10 + $0xa0] sm:$0xff]
        %v597 = vld [vmem:[#allocation10 + $0xa8] sm:$0xff]
        %v598 = vld [vmem:[#allocation10 + $0xb0] sm:$0xff]
        %v599 = vld [vmem:[#allocation10 + $0xb8] sm:$0xff]
        %v600 = vld [vmem:[#allocation10 + $0xc0] sm:$0xff]
        %v601 = vld [vmem:[#allocation10 + $0xc8] sm:$0xff]
        %v602 = vld [vmem:[#allocation10 + $0xd0] sm:$0xff]
        %v603 = vld [vmem:[#allocation10 + $0xd8] sm:$0xff]
        %v604 = vld [vmem:[#allocation10 + $0xe0] sm:$0xff]
        %v605 = vld [vmem:[#allocation10 + $0xe8] sm:$0xff]
        %v606 = vld [vmem:[#allocation10 + $0xf0] sm:$0xff]
        %v607 = vld [vmem:[#allocation10 + $0xf8] sm:$0xff]
        %v608 = vld [vmem:[%s5] sm:$0x1]
        %v610 = vlaneseq
        %v611 = vshrl.u32 %v610, 7
        %v612 = vsub.s32 0, %v611
        %v613 = vrot.slane %v608, %v612
        %615 = vmatprep.subr.mxu0 0.0
        %616 = vmatpush1.msra.mxu0 %v591
        %617 = vmatprep.subr.mxu0 0.0
        %618 = vmatpush1.msra.mxu0 %v590
        %619 = vmatprep.subr.mxu0 0.0
        %620 = vmatpush1.msra.mxu0 %v589
        %621 = vmatprep.subr.mxu0 0.0
        %622 = vmatpush1.msra.mxu0 %v588
        %623 = vmatprep.subr.mxu0 0.0
        %624 = vmatpush1.msra.mxu0 %v587
        %625 = vmatprep.subr.mxu0 0.0
        %626 = vmatpush1.msra.mxu0 %v586
        %627 = vmatprep.subr.mxu0 0.0
        %628 = vmatpush1.msra.mxu0 %v585
        %629 = vmatprep.subr.mxu0 0.0
        %630 = vmatpush1.msra.mxu0 %v584
        %631 = vmatprep.subr.mxu0 0.0
        %632 = vmatpush1.msra.mxu0 %v583
        %633 = vmatprep.subr.mxu0 0.0
        %634 = vmatpush1.msra.mxu0 %v582
        %635 = vmatprep.subr.mxu0 0.0
        %636 = vmatpush1.msra.mxu0 %v581
        %637 = vmatprep.subr.mxu0 0.0
        %638 = vmatpush1.msra.mxu0 %v580
        %639 = vmatprep.subr.mxu0 0.0
        %640 = vmatpush1.msra.mxu0 %v579
        %641 = vmatprep.subr.mxu0 0.0
        %642 = vmatpush1.msra.mxu0 %v578
        %643 = vmatprep.subr.mxu0 0.0
        %644 = vmatpush1.msra.mxu0 %v577
        %645 = vmatprep.subr.mxu0 0.0
        %646 = vmatpush1.msra.mxu0 %v576
        %647 = vmatprep.subr.mxu0 0.0
        %648 = vmatpush2.msra.mxu0 %v607
        %649 = vmatprep.subr.mxu0 0.0
        %650 = vmatpush2.msra.mxu0 %v606
        %651 = vmatprep.subr.mxu0 0.0
        %652 = vmatpush2.msra.mxu0 %v605
        %653 = vmatprep.subr.mxu0 0.0
        %654 = vmatpush2.msra.mxu0 %v604
        %655 = vmatprep.subr.mxu0 0.0
        %656 = vmatpush2.msra.mxu0 %v603
        %657 = vmatprep.subr.mxu0 0.0
        %658 = vmatpush2.msra.mxu0 %v602
        %659 = vmatprep.subr.mxu0 0.0
        %660 = vmatpush2.msra.mxu0 %v601
        %661 = vmatprep.subr.mxu0 0.0
        %662 = vmatpush2.msra.mxu0 %v600
        %663 = vmatprep.subr.mxu0 0.0
        %664 = vmatpush2.msra.mxu0 %v599
        %665 = vmatprep.subr.mxu0 0.0
        %666 = vmatpush2.msra.mxu0 %v598
        %667 = vmatprep.subr.mxu0 0.0
        %668 = vmatpush2.msra.mxu0 %v597
        %669 = vmatprep.subr.mxu0 0.0
        %670 = vmatpush2.msra.mxu0 %v596
        %671 = vmatprep.subr.mxu0 0.0
        %672 = vmatpush2.msra.mxu0 %v595
        %673 = vmatprep.subr.mxu0 0.0
        %674 = vmatpush2.msra.mxu0 %v594
        %675 = vmatprep.subr.mxu0 0.0
        %676 = vmatpush2.msra.mxu0 %v593
        %677 = vmatprep.subr.mxu0 0.0
        %678 = vmatpush2.msra.mxu0 %v592
        %679 = vmatprep.mubr.f32.mxu0 %v569
        %680 = vmatmul.mubr.f32.gmra.mxu0 %v568
        %v681 = vpop.f32.mrf.mxu0
        %v682 = vadd.f32 %v613, %v681
        %v683 = vpop.f32.mrf.mxu0
        %684 = vmatprep.mubr.f32.mxu0 %v571
        %685 = vmatmul.mubr.f32.gmra.mxu0 %v570
        %v686 = vpop.f32.mrf.mxu0
        %v687 = vadd.f32 %v613, %v686
        %v688 = vpop.f32.mrf.mxu0
        %689 = vmatprep.mubr.f32.mxu0 %v573
        %690 = vmatmul.mubr.f32.gmra.mxu0 %v572
        %v691 = vpop.f32.mrf.mxu0
        %v692 = vadd.f32 %v613, %v691
        %v693 = vpop.f32.mrf.mxu0
        %694 = vmatprep.mubr.f32.mxu0 %v575
        %695 = vmatmul.mubr.f32.gmra.mxu0 %v574
        %v696 = vpop.f32.mrf.mxu0
        %v697 = vadd.f32 %v613, %v696
        %v698 = vpop.f32.mrf.mxu0
        %699 = vdwg.mxu0
        %v700 = vmax.f32 %v682, 0.0
        %v701 = vmax.f32 %v687, 0.0
        %v702 = vmax.f32 %v692, 0.0
        %v703 = vmax.f32 %v697, 0.0
        %v704 = vld [vmem:[%s6] sm:$0x1]
        %v706 = vlaneseq
        %v707 = vshrl.u32 %v706, 7
        %v708 = vsub.s32 0, %v707
        %v709 = vrot.slane %v704, %v708
        %v711 = vmul.f32 %v700, %v709
        %v712 = vmul.f32 %v701, %v709
        %v713 = vmul.f32 %v702, %v709
        %v714 = vmul.f32 %v703, %v709
        %715 = vadd.xlane.f32.xlu0 %v711
        %v716 = vpop.xlane.xlu0 %715
        %717 = vadd.xlane.f32.xlu0 %v712
        %v718 = vpop.xlane.xlu0 %717
        %719 = vadd.xlane.f32.xlu0 %v713
        %v720 = vpop.xlane.xlu0 %719
        %721 = vadd.xlane.f32.xlu0 %v714
        %v722 = vpop.xlane.xlu0 %721
        %s723 = sld [smem:[#allocation3]]
        %v724 = vstv %s723
        %v725 = vadd.f32 %v716, %v724
        %v726 = vadd.f32 %v718, %v724
        %v727 = vadd.f32 %v720, %v724
        %v728 = vadd.f32 %v722, %v724
        %v729 = vxor.u32 %v725, 2147483648
        %v730 = vxor.u32 %v726, 2147483648
        %v731 = vxor.u32 %v727, 2147483648
        %v732 = vxor.u32 %v728, 2147483648
        %v733 = vmul.f32 %v729, 1.442695
        %v734 = vpow.pop %v733
        %v735 = vmul.f32 %v730, 1.442695
        %v736 = vpow.pop %v735
        %v737 = vmul.f32 %v731, 1.442695
        %v738 = vpow.pop %v737
        %v739 = vmul.f32 %v732, 1.442695
        %v740 = vpow.pop %v739
        %v741 = vadd.f32 %v734, 1.0
        %v742 = vadd.f32 %v736, 1.0
        %v743 = vadd.f32 %v738, 1.0
        %v744 = vadd.f32 %v740, 1.0
        %v745 = vrcp.pop %v741
        %v746 = vmul.f32 1.0, %v745
        %v747 = vrcp.pop %v742
        %v748 = vmul.f32 1.0, %v747
        %v749 = vrcp.pop %v743
        %v750 = vmul.f32 1.0, %v749
        %v751 = vrcp.pop %v744
        %v752 = vmul.f32 1.0, %v751
        %v753 = vsub.f32 %v424, %v542
        %v754 = vsub.f32 %v425, %v547
        %v755 = vsub.f32 %v426, %v552
        %v756 = vsub.f32 %v427, %v557
        %v757 = vmul.f32 %v746, %v753
        %v758 = vmul.f32 %v748, %v754
        %v759 = vmul.f32 %v750, %v755
        %v760 = vmul.f32 %v752, %v756
        %v761 = vadd.f32 %v542, %v757
        %v762 = vadd.f32 %v547, %v758
        %v763 = vadd.f32 %v552, %v759
        %v764 = vadd.f32 %v557, %v760
        %765 = vst [vmem:[%s407] sm:$0xff] %v761
        %766 = vst [vmem:[%s407 + $0x8] sm:$0xff] %v762
        %767 = vst [vmem:[%s407 + $0x10] sm:$0xff] %v763
        %768 = vst [vmem:[%s407 + $0x18] sm:$0xff] %v764
        %s769 = sand.u32 %s216, 1
        %s770 = scalar_lea.sflag [#allocation6], %s769
        %s771 = sand.u32 %s216, 1
        %s772 = smul.addr %s771, 32
        %s773 = scalar_lea.vmem [#allocation12], %s772
        // Predicated region
        $region69: #{tpu_custom_call.1} parent=51 // pred_check
          %p774 = pneg %p226
        $region70: #{tpu_custom_call.1} parent=51 // pred_check_branch
          %776 = sbr.rel (%p774) target = $region72
        $region71: #{tpu_custom_call.1} parent=51 // pred_region
          %s777 = smul.u32 4, %s30
          %s778 = ssub.s32 7, %s777
          %p779 = scmp.lt.s32.totalorder %s778, 4
          %s780 = scalar_select %p779, %s778, 4
          %s781 = smul.u32 128, %s780
          %s783 = ssub.s32 512, %s781
          %784 = vsyncadd %s770, %s783
          %p785 = scmp.ne.s32.totalorder 0, %s781
          %s786 = smul.addr %s777, 128
          %s787 = scalar_lea.hbm %s8, %s786
          %s788 = smul.u32 8, %s780
          %s789 = sshll.u32 %s773, 4
          %s790 = int_to_ptr.vmem [resolvable:$true] %s789
          %s791 = sshll.u32 %s788, 4
          %795 = dma.vmem_to_hbm [thread:$0]  (%p785), %s790, %s791, %s787, %s770, 128, 128, 8
        $region72: #{tpu_custom_call.1} parent=51 // pred_fallthru
          _
      $region52: #{tpu_custom_call.1} parent=5 // pred_fallthru
        _
      %p796 = scmp.le.s32.totalorder 2, %s25
      // Predicated region
      $region73: #{tpu_custom_call.1} parent=5 // pred_check
        %p797 = pneg %p796
      $region74: #{tpu_custom_call.1} parent=5 // pred_check_branch
        %799 = sbr.rel (%p797) target = $region76
      $region75: #{tpu_custom_call.1} parent=5 // pred_region
        %s800 = ssub.s32 %s25, 2
        // Predicated region
        $region77: #{tpu_custom_call.1} parent=75 // pred_check
          %p801 = pneg %p232
        $region78: #{tpu_custom_call.1} parent=75 // pred_check_branch
          %803 = sbr.rel (%p801) target = $region80
        $region79: #{tpu_custom_call.1} parent=75 // pred_region
          %s804 = sand.u32 %s217, 1
          %s805 = scalar_lea.sflag [#allocation6], %s804
          %s806 = sand.u32 %s217, 1
          %s807 = smul.addr %s806, 32
          %s808 = scalar_lea.vmem [#allocation12], %s807
          %809 = dma.done %s805, 512
        $region80: #{tpu_custom_call.1} parent=75 // pred_fallthru
          _
      $region76: #{tpu_custom_call.1} parent=5 // pred_fallthru
        _
    $region6: #{tpu_custom_call.1} parent=1 // loop_footer
      %s29 = sadd.s32 1, %s25
    $region7: #{tpu_custom_call.1} parent=1 // loop_footer_branch
      %24 = sbr.rel target = $region3
    $region8: #{tpu_custom_call.1} parent=1 // loop_exit
      _
    %810 = vsyncpa [#allocation5], 1
    %s811 = scalar_lea.sflag [#allocation5], 1
    %812 = vsyncpa %s811, 1
    %813 = vsyncpa [#allocation8], 1
    %s814 = scalar_lea.sflag [#allocation8], 1
    %815 = vsyncpa %s814, 1
    %816 = vsyncpa [#allocation11], 1
    %817 = vsyncpa [#allocation6], 1
    %s818 = scalar_lea.sflag [#allocation6], 1
    %819 = vsyncpa %s818, 1

</llo_original>
